<compile_context>
chip_gen: v7x
topology: tpu7x:2x2x1
jax: 0.10.0
libtpu: 0.0.40
codegen_flags: <defaults>
</compile_context>

<pallas_src>
import functools

import jax
import jax.numpy as jnp
from jax.experimental import pallas as pl
from jax.experimental.pallas import tpu as pltpu


# ------------------------- Kernel A: fused pooling + 1x1-conv projection ----------------------

def _pool_proj_kernel(x_ref, w_ref, o_ref, acc_ref, *, inv_total, hw, thw, need_mask):
    """x_ref: (b, m, c, thw) tile; w_ref: (out_c, c); o_ref: (b, out_c); acc_ref: (b, c) f32."""
    hj = pl.program_id(0)

    @pl.when(hj == 0)
    def _():
        acc_ref[...] = jnp.zeros_like(acc_ref)

    x = x_ref[...].astype(jnp.float32)                         # (b, m, c, thw)
    if need_mask:                                              # ragged last hw tile
        lane = jax.lax.broadcasted_iota(jnp.int32, x.shape, dimension=3)
        x = jnp.where(lane < (hw - hj * thw), x, 0.0)
    s = jnp.sum(x, axis=1)                                     # VPU adds over the m views
    acc_ref[...] += jnp.sum(s, axis=-1)                        # single XLU lane-reduce per step

    @pl.when(hj == pl.num_programs(0) - 1)
    def _():
        w = w_ref[...].astype(jnp.float32)                     # (out_c, c), native dtype in HBM
        z = jax.lax.dot_general(acc_ref[...], w,
                                dimension_numbers=(((1,), (1,)), ((), ())),
                                preferred_element_type=jnp.float32)
        o_ref[...] = (z * inv_total).astype(o_ref.dtype)


# ------------------------- Kernel B: channel-tiled pooling (projection done in JAX) -----------

def _pool_kernel(x_ref, o_ref, *, inv_total, hw, thw, need_mask):
    """x_ref: (b, m, tc, thw) tile; o_ref: (b, tc) f32 accumulator, resident across hw axis."""
    hj = pl.program_id(1)

    @pl.when(hj == 0)
    def _():
        o_ref[...] = jnp.zeros_like(o_ref)

    x = x_ref[...].astype(jnp.float32)
    if need_mask:
        lane = jax.lax.broadcasted_iota(jnp.int32, x.shape, dimension=3)
        x = jnp.where(lane < (hw - hj * thw), x, 0.0)
    s = jnp.sum(x, axis=1)
    o_ref[...] += jnp.sum(s, axis=-1)

    @pl.when(hj == pl.num_programs(1) - 1)
    def _():
        o_ref[...] = o_ref[...] * inv_total


# ------------------------- tiling helpers & wrapper --------------------------------------------

def _largest_aligned_divisor(total, align, limit):
    """Largest d <= limit with d % align == 0 and total % d == 0; None if no such divisor."""
    limit = min(limit, total)
    d = (limit // align) * align
    while d >= align:
        if total % d == 0:
            return d
        d -= align
    return None


def _pick_lane_tile(total, cap):
    """Lane-dim tile: full extent if it fits, else a 128-multiple <= cap (divisor preferred)."""
    if total <= cap:
        return total
    cap128 = max((cap // 128) * 128, 128)
    d = _largest_aligned_divisor(total, 128, cap128)
    return d if d is not None else cap128          # ragged last tile handled by in-kernel mask


def objectneck_v2_forward(x, proj_weight):
    """
    x:           (b, c, h, w, m)      multi-view input features
    proj_weight: (out_channels, c)    MLP1D(num_mlp=1) == Conv1d(c, out, 1, bias=False) weight[..., 0]
    returns:     (b, out_channels, 1) z_x, same dtype as x
    """
    b, c, h, w, m = x.shape
    out_c = proj_weight.shape[0]
    hw = h * w
    itemsize = jnp.dtype(x.dtype).itemsize

    # PyTorch does a raw .view(b*m, c, h, w) on the (b, c, h, w, m) tensor; a row-major reshape
    # to (b, m, c, h*w) is bit-identical to that reinterpretation.
    x4 = x.reshape(b, m, c, hw)

    # --- VMEM budget (automatically halves on v7x's 64 MiB VMEM) ---
    try:
        vmem_cap = pltpu.get_tpu_info().vmem_capacity_bytes
    except Exception:
        vmem_cap = 64 * 1024 * 1024
    usable = min(int(vmem_cap * 0.7), 80 * 1024 * 1024)
    block_budget = max(usable // 2 - (1 << 20), 1 << 20)      # per double-buffered input block

    # --- tiling: shrink the channel tile first so every (b, m) slab stays HBM-contiguous;
    #     only tile hw when the channel tile is at its floor ---
    row_bytes = b * m * hw * itemsize                         # bytes per channel at full hw
    if c >= 256 and c % 128 == 0:
        # >= 2 channel blocks -> the "parallel" axis shards across v7x's two TensorCores
        tc_cap = min(c // 2, max(block_budget // max(row_bytes, 1), 128))
        tc = _largest_aligned_divisor(c, 128, tc_cap) or 128
    else:
        tc = c                                                # small c: fused-projection path
    cap_hw = max(block_budget // max(b * m * tc * itemsize, 1), 128)
    thw = _pick_lane_tile(hw, cap_hw)
    if tc == c and thw == hw and hw >= 256:
        # a 1-step reduction has no DMA/compute overlap: split hw into ~2 chunks
        thw = (_largest_aligned_divisor(hw, 128, max(hw // 2, 128))
               or max(((hw // 2) // 128) * 128, 128))

    n_c = c // tc
    n_hw = -(-hw // thw)
    need_mask = (hw % thw) != 0
    inv_total = 1.0 / float(m * hw)

    block_bytes = b * m * tc * thw * itemsize
    w_bytes = out_c * c * jnp.dtype(proj_weight.dtype).itemsize

    if n_c == 1:
        # ---- fused pooling + projection: one pallas_call, pooled features never touch HBM ----
        vmem_need = (2 * block_bytes + 2 * w_bytes + 2 * b * out_c * itemsize
                     + b * c * 4 + (2 << 20))
        vmem_limit = min(max(vmem_need, 8 << 20), int(vmem_cap * 0.9))
        z = pl.pallas_call(
            functools.partial(_pool_proj_kernel, inv_total=inv_total,
                              hw=hw, thw=thw, need_mask=need_mask),
            out_shape=jax.ShapeDtypeStruct((b, out_c), x.dtype),
            grid_spec=pltpu.PrefetchScalarGridSpec(
                num_scalar_prefetch=0,
                grid=(n_hw,),                                  # reduction axis
                in_specs=[pl.BlockSpec((b, m, c, thw), lambda hj: (0, 0, 0, hj)),
                          pl.BlockSpec((out_c, c), lambda hj: (0, 0))],
                out_specs=pl.BlockSpec((b, out_c), lambda hj: (0, 0)),
                scratch_shapes=[pltpu.VMEM((b, c), jnp.float32)]),
            compiler_params=pltpu.CompilerParams(
                dimension_semantics=("arbitrary",),
                vmem_limit_bytes=vmem_limit),
        )(x4, proj_weight)
    else:
        # ---- channel-tiled pooling (parallel axis -> 2-TC split on v7x); the tiny projection
        #      matmul is plain JAX (launch overhead would dominate a Pallas kernel) ----
        vmem_need = 2 * block_bytes + 2 * b * tc * 4 + (2 << 20)
        vmem_limit = min(max(vmem_need, 8 << 20), int(vmem_cap * 0.9))
        pooled = pl.pallas_call(
            functools.partial(_pool_kernel, inv_total=inv_total,
                              hw=hw, thw=thw, need_mask=need_mask),
            out_shape=jax.ShapeDtypeStruct((b, c), jnp.float32),
            grid_spec=pltpu.PrefetchScalarGridSpec(
                num_scalar_prefetch=0,
                grid=(n_c, n_hw),                              # reduction (hw) axis last
                in_specs=[pl.BlockSpec((b, m, tc, thw), lambda ci, hj: (0, 0, ci, hj))],
                out_specs=pl.BlockSpec((b, tc), lambda ci, hj: (0, ci))),
            compiler_params=pltpu.CompilerParams(
                dimension_semantics=("parallel", "arbitrary"),
                vmem_limit_bytes=vmem_limit),
        )(x4)
        z = jnp.einsum('bc,oc->bo', pooled, proj_weight,
                       preferred_element_type=jnp.float32).astype(x.dtype)

    return z[..., None]                                        # (b, out_channels, 1)


# ------------------------- reference & demo -----------------------------------------------------

def _reference(x, proj_w):
    b, c, h, w, m = x.shape
    x_v = x.reshape(b * m, c, h * w)                 # == torch .view(b*m, c, h, w)
    x_pool = jnp.mean(x_v.astype(jnp.float32), axis=-1)
    x_pool = x_pool.reshape(b, m, c).mean(axis=1)    # .view(b, m, c, -1).mean(dim=1)
    return (x_pool @ proj_w.astype(jnp.float32).T)[..., None]


if __name__ == "__main__":
    key = jax.random.PRNGKey(0)
    k1, k2, k3, k4 = jax.random.split(key, 4)

    # Case 1 (small c): exercises the fused pooling+projection kernel.
    b, c, h, w, m = 2, 32, 16, 16, 2
    out_channels = 32
    x = jax.random.normal(k1, (b, c, h, w, m), dtype=jnp.float32)
    proj_w = jax.random.normal(k2, (out_channels, c), dtype=jnp.float32) * 0.05
    z = jax.block_until_ready(objectneck_v2_forward(x, proj_w))
    ref = _reference(x, proj_w)
    assert z.shape == (b, out_channels, 1), f"bad output shape {z.shape}"
    assert jnp.allclose(z.astype(jnp.float32), ref, atol=1e-4, rtol=1e-4), "mismatch (fused path)"

    # Case 2 (c >= 256): exercises the channel-tiled (2-TC parallel) path.
    b2, c2, h2, w2, m2 = 2, 256, 8, 8, 2
    out2 = 64
    x2 = jax.random.normal(k3, (b2, c2, h2, w2, m2), dtype=jnp.float32)
    proj_w2 = jax.random.normal(k4, (out2, c2), dtype=jnp.float32) * 0.02
    z2 = jax.block_until_ready(objectneck_v2_forward(x2, proj_w2))
    ref2 = _reference(x2, proj_w2)
    assert z2.shape == (b2, out2, 1), f"bad output shape {z2.shape}"
    assert jnp.allclose(z2.astype(jnp.float32), ref2, atol=1e-4, rtol=1e-4), "mismatch (tiled path)"

    print("KERNEL_OK")
</pallas_src>

<mosaic_0001>
module attributes {stable_mosaic.version = 11 : i64} {
  func.func @_pool_proj_kernel(%arg0: i32, %arg1: memref<2x2x32x128xf32, #tpu.memory_space<vmem>>, %arg2: memref<32x32xf32, #tpu.memory_space<vmem>>, %arg3: memref<2x32xf32, #tpu.memory_space<vmem>>, %arg4: memref<2x32xf32, #tpu.memory_space<vmem>>) attributes {dimension_semantics = [#tpu.dimension_semantics<arbitrary>], iteration_bounds = array<i64: 2>, scalar_prefetch = 0 : i64, scratch_operands = 1 : i64, tpu.core_type = #tpu.core_type<tc>, window_params = [{transform_indices = @transform_0, window_bounds = array<i64: 2, 2, 32, 128>}, {pipeline_mode = #tpu.pipeline_mode<synchronous>, transform_indices = @transform_1, window_bounds = array<i64: 32, 32>}, {pipeline_mode = #tpu.pipeline_mode<synchronous>, transform_indices = @transform_2, window_bounds = array<i64: 2, 32>}]} {
    %c0_i32 = arith.constant 0 : i32
    %0 = arith.cmpi eq, %arg0, %c0_i32 : i32
    %1 = arith.extui %0 : i1 to i32
    %c0_i32_0 = arith.constant 0 : i32
    %2 = arith.cmpi ne, %1, %c0_i32_0 : i32
    scf.if %2 {
      %cst_10 = arith.constant 0.000000e+00 : f32
      %12 = vector.broadcast %cst_10 : f32 to vector<2x32xf32>
      %c0_11 = arith.constant 0 : index
      %c0_12 = arith.constant 0 : index
      %13 = vector.load %arg4[%c0_11, %c0_12] : memref<2x32xf32, #tpu.memory_space<vmem>>, vector<2x32xf32>
      tpu.vector_store %arg4[%c0_11, %c0_12], %12 {strides = array<i32>} : memref<2x32xf32, #tpu.memory_space<vmem>>, vector<2x32xf32>,
    } else {
    }
    %c0 = arith.constant 0 : index
    %c0_1 = arith.constant 0 : index
    %c0_2 = arith.constant 0 : index
    %c0_3 = arith.constant 0 : index
    %3 = vector.load %arg1[%c0, %c0_1, %c0_2, %c0_3] : memref<2x2x32x128xf32, #tpu.memory_space<vmem>>, vector<2x2x32x128xf32>
    %cst = arith.constant dense<0.000000e+00> : vector<2x32x128xf32>
    %4 = vector.multi_reduction <add>, %3, %cst [1] : vector<2x2x32x128xf32> to vector<2x32x128xf32>
    %c0_4 = arith.constant 0 : index
    %c0_5 = arith.constant 0 : index
    %5 = vector.load %arg4[%c0_4, %c0_5] : memref<2x32xf32, #tpu.memory_space<vmem>>, vector<2x32xf32>
    %cst_6 = arith.constant dense<0.000000e+00> : vector<2x32xf32>
    %6 = vector.multi_reduction <add>, %4, %cst_6 [2] : vector<2x32x128xf32> to vector<2x32xf32>
    %7 = arith.addf %5, %6 : vector<2x32xf32>
    %c0_7 = arith.constant 0 : index
    %c0_8 = arith.constant 0 : index
    %8 = vector.load %arg4[%c0_7, %c0_8] : memref<2x32xf32, #tpu.memory_space<vmem>>, vector<2x32xf32>
    tpu.vector_store %arg4[%c0_7, %c0_8], %7 {strides = array<i32>} : memref<2x32xf32, #tpu.memory_space<vmem>>, vector<2x32xf32>,
    %c1_i32 = arith.constant 1 : i32
    %9 = arith.cmpi eq, %arg0, %c1_i32 : i32
    %10 = arith.extui %9 : i1 to i32
    %c0_i32_9 = arith.constant 0 : i32
    %11 = arith.cmpi ne, %10, %c0_i32_9 : i32
    scf.if %11 {
      %c0_10 = arith.constant 0 : index
      %c0_11 = arith.constant 0 : index
      %12 = vector.load %arg2[%c0_10, %c0_11] : memref<32x32xf32, #tpu.memory_space<vmem>>, vector<32x32xf32>
      %c0_12 = arith.constant 0 : index
      %c0_13 = arith.constant 0 : index
      %13 = vector.load %arg4[%c0_12, %c0_13] : memref<2x32xf32, #tpu.memory_space<vmem>>, vector<2x32xf32>
      %cst_14 = arith.constant dense<0.000000e+00> : vector<2x32xf32>
      %14 = tpu.matmul %13, %12, %cst_14 {dimension_numbers = #tpu.dot_dimension_numbers<[1], [1], [0], [0], [0, 0, 1, 0], [], []>} : vector<2x32xf32>, vector<32x32xf32>, vector<2x32xf32> -> vector<2x32xf32>
      %cst_15 = arith.constant 0.001953125 : f32
      %15 = vector.broadcast %cst_15 : f32 to vector<2x32xf32>
      %16 = arith.mulf %14, %15 : vector<2x32xf32>
      %c0_16 = arith.constant 0 : index
      %c0_17 = arith.constant 0 : index
      %17 = vector.load %arg3[%c0_16, %c0_17] : memref<2x32xf32, #tpu.memory_space<vmem>>, vector<2x32xf32>
      tpu.vector_store %arg3[%c0_16, %c0_17], %16 {strides = array<i32>} : memref<2x32xf32, #tpu.memory_space<vmem>>, vector<2x32xf32>,
    } else {
    }
    return
  }
  func.func @transform_0(%arg0: i32) -> (i32, i32, i32, i32) {
    %c0_i32 = arith.constant 0 : i32
    %c0_i32_0 = arith.constant 0 : i32
    %c0_i32_1 = arith.constant 0 : i32
    %c0_i32_2 = arith.constant 0 : i32
    return %c0_i32, %c0_i32_0, %c0_i32_1, %arg0 : i32, i32, i32, i32
  }
  func.func @transform_1(%arg0: i32) -> (i32, i32) {
    %c0_i32 = arith.constant 0 : i32
    %c0_i32_0 = arith.constant 0 : i32
    %c0_i32_1 = arith.constant 0 : i32
    return %c0_i32, %c0_i32_0 : i32, i32
  }
  func.func @transform_2(%arg0: i32) -> (i32, i32) {
    %c0_i32 = arith.constant 0 : i32
    %c0_i32_0 = arith.constant 0 : i32
    %c0_i32_1 = arith.constant 0 : i32
    return %c0_i32, %c0_i32_0 : i32, i32
  }
}

</mosaic_0001>

<llo_original>
// kernel: tpu_custom_call.1
$region0: #{tpu_custom_call.1}
  #allocation0 [shape = 'u32[]', space=smem, size = 0x4, offset = 0x4, fixed_abs, tag = 'smem constant byte address 0x4 - core index']
  #allocation1 [shape = 'u32[144,128]{1,0:T(1,128)}', space=vmem, size = 0x12000, scoped, tag = 'internal scratch']
  #allocation2 [shape = 'f32[2,32]{1,0:T(2,128)}', space=vmem, size = 0x400, scoped, tag = 'scratch operand']
  %s0 = inlined_call_operand.hbm [shape: f32[2,2,32,256], index: 0, kind: input, shape index: {}]
  %s1 = inlined_call_operand.hbm [shape: f32[32,32], index: 1, kind: input, shape index: {}]
  %s2 = inlined_call_operand.hbm [shape: f32[2,32], index: 2, kind: output, shape index: {}]
  %s3 = sld [smem:[#allocation0]]
  $region57: #{tpu_custom_call.1} parent=0
    _
  %s5 = ssub.s32 1, %s3
  %s6 = scalar_select 0, %s5, %s3
  $region1: #{tpu_custom_call.1} parent=0
    #allocation3 [shape = 'u8[131072]{0}', space=vmem, size = 0x20000, scoped, tag = 'input window, operand 0']
    #allocation4 [shape = 's32[2]{0}', space=sflag, size = 0x8, scoped, tag = 'scoped memory for tpu_custom_call.1']
    #allocation5 [shape = 's32[2]{0}', space=sflag, size = 0x8, scoped, tag = 'scoped memory for tpu_custom_call.1']
    #allocation6 [shape = 'u8[16384]{0}', space=vmem, size = 0x4000, scoped, tag = 'input window, operand 1, single buffered']
    #allocation7 [shape = 's32[1]{0}', space=sflag, size = 0x4, scoped, tag = 'scoped memory for tpu_custom_call.1']
    #allocation8 [shape = 'u8[1024]{0}', space=vmem, size = 0x400, scoped, tag = 'output window, operand 0, single buffered']
    %7 = vsyncpa [#allocation4], 0
    %s8 = scalar_lea.sflag [#allocation4], 1
    %9 = vsyncpa %s8, 0
    %10 = vsyncpa [#allocation7], 0
    %11 = vsyncpa [#allocation5], 0
    loop: start=0, step=1, limit=4
    $region2: #{tpu_custom_call.1} parent=1 // loop_pre_header
      _
    $region3: #{tpu_custom_call.1} parent=1 // loop_header
      %s13 = sphi 0, %s17
      %p14 = scmp.ge.s32.totalorder %s13, 4
      %s23 = sphi 0, %s25
      %s26 = sphi 0, %s23
      %s27 = sphi 0, %s26
      %s43 = sphi 0, %s27
      %s47 = sphi 0, %s47
      %s49 = sphi 0, %s47
      %s50 = sphi 0, %s49
      %s64 = sphi 0, %s50
      %s68 = sphi 0, %s68
      %s70 = sphi 0, %s68
      %s71 = sphi 0, %s70
      %s85 = sphi 0, %s71
    $region4: #{tpu_custom_call.1} parent=1 // loop_header_branch
      %16 = sbr.rel (%p14) target = $region8
    $region5: #{tpu_custom_call.1} parent=1 // loop_body
      %s18 = ssub.s32 %s13, 1
      %s19 = ssub.s32 %s13, 2
      %s20 = sadd.s32 %s13, 1
      %s21 = ssub.s32 %s13, %s20
      %p22 = scmp.eq.s32.totalorder %s21, 0
      %s24 = sadd.s32 %s23, 1
      %s25 = scalar_select %p22, %s23, %s24
      %p28 = pneg %p22
      %p29 = scmp.eq.s32.totalorder %s13, 1
      %p30 = por %p28, %p29
      %p31 = scmp.ne.s32.totalorder %s23, %s26
      %p32 = scmp.eq.s32.totalorder %s13, 0
      %p33 = por %p31, %p32
      %p34 = scmp.ne.s32.totalorder %s23, %s26
      %p35 = scmp.eq.s32.totalorder %s18, 1
      %p36 = por %p34, %p35
      %p37 = scmp.ne.s32.totalorder %s26, %s27
      %p38 = scmp.eq.s32.totalorder %s18, 0
      %p39 = por %p37, %p38
      %p40 = scmp.ne.s32.totalorder %s26, %s27
      %p41 = scmp.eq.s32.totalorder %s19, 1
      %p42 = por %p40, %p41
      %p44 = scmp.ne.s32.totalorder %s27, %s43
      %p45 = scmp.eq.s32.totalorder %s19, 0
      %p46 = por %p44, %p45
      %s48 = sadd.s32 %s47, 1
      %p51 = scmp.eq.s32.totalorder %s13, 1
      %p52 = scmp.ne.s32.totalorder %s47, %s49
      %p53 = scmp.eq.s32.totalorder %s13, 0
      %p54 = por %p52, %p53
      %p55 = scmp.ne.s32.totalorder %s47, %s49
      %p56 = scmp.eq.s32.totalorder %s18, 1
      %p57 = por %p55, %p56
      %p58 = scmp.ne.s32.totalorder %s49, %s50
      %p59 = scmp.eq.s32.totalorder %s18, 0
      %p60 = por %p58, %p59
      %p61 = scmp.ne.s32.totalorder %s49, %s50
      %p62 = scmp.eq.s32.totalorder %s19, 1
      %p63 = por %p61, %p62
      %p65 = scmp.ne.s32.totalorder %s50, %s64
      %p66 = scmp.eq.s32.totalorder %s19, 0
      %p67 = por %p65, %p66
      %s69 = sadd.s32 %s68, 1
      %p72 = scmp.eq.s32.totalorder %s13, 1
      %p73 = scmp.ne.s32.totalorder %s68, %s70
      %p74 = scmp.eq.s32.totalorder %s13, 0
      %p75 = por %p73, %p74
      %p76 = scmp.ne.s32.totalorder %s68, %s70
      %p77 = scmp.eq.s32.totalorder %s18, 1
      %p78 = por %p76, %p77
      %p79 = scmp.ne.s32.totalorder %s70, %s71
      %p80 = scmp.eq.s32.totalorder %s18, 0
      %p81 = por %p79, %p80
      %p82 = scmp.ne.s32.totalorder %s70, %s71
      %p83 = scmp.eq.s32.totalorder %s19, 1
      %p84 = por %p82, %p83
      %p86 = scmp.ne.s32.totalorder %s71, %s85
      %p87 = scmp.eq.s32.totalorder %s19, 0
      %p88 = por %p86, %p87
      %p89 = scmp.le.s32.totalorder 1, %s13
      %p90 = scmp.lt.s32.totalorder %s13, 3
      %p91 = pnand %p89, %p90
      %p92 = pneg %p91
      // Predicated region
      $region9: #{tpu_custom_call.1} parent=5 // pred_check
        _
      $region10: #{tpu_custom_call.1} parent=5 // pred_check_branch
        %94 = sbr.rel (%p91) target = $region12
      $region11: #{tpu_custom_call.1} parent=5 // pred_region
        %s95 = ssub.s32 %s13, 1
        // Predicated region
        $region13: #{tpu_custom_call.1} parent=11 // pred_check
          %p96 = pneg %p60
        $region14: #{tpu_custom_call.1} parent=11 // pred_check_branch
          %98 = sbr.rel (%p96) target = $region16
        $region15: #{tpu_custom_call.1} parent=11 // pred_region
          %s100 = ssub.s32 512, 512
          %101 = vsyncadd [#allocation7], %s100
          %s102 = sshll.u32 [#allocation6], 4
          %s103 = int_to_ptr.vmem [resolvable:$true] %s102
          %108 = dma.hbm_to_vmem [thread:$0]  %s1, 512, %s103, [#allocation7], 128, 128, 8
        $region16: #{tpu_custom_call.1} parent=11 // pred_fallthru
          _
      $region12: #{tpu_custom_call.1} parent=5 // pred_fallthru
        _
      %p109 = scmp.lt.s32.totalorder %s13, 2
      // Predicated region
      $region17: #{tpu_custom_call.1} parent=5 // pred_check
        %p110 = pneg %p109
      $region18: #{tpu_custom_call.1} parent=5 // pred_check_branch
        %112 = sbr.rel (%p110) target = $region20
      $region19: #{tpu_custom_call.1} parent=5 // pred_region
        // Predicated region
        $region21: #{tpu_custom_call.1} parent=19 // pred_check
          %p113 = pneg %p33
        $region22: #{tpu_custom_call.1} parent=19 // pred_check_branch
          %115 = sbr.rel (%p113) target = $region24
        $region23: #{tpu_custom_call.1} parent=19 // pred_region
          %s116 = sand.u32 %s23, 1
          %s117 = scalar_lea.sflag [#allocation4], %s116
          %s118 = sand.u32 %s23, 1
          %s119 = smul.addr %s118, 128
          %s120 = scalar_lea.vmem [#allocation3], %s119
          %s122 = ssub.s32 2048, 2048
          %123 = vsyncadd %s117, %s122
          %s124 = smul.addr %s13, 128
          %s125 = scalar_lea.hbm %s0, %s124
          %s126 = sshll.u32 %s120, 4
          %s127 = int_to_ptr.vmem [resolvable:$true] %s126
          %132 = dma.hbm_to_vmem [thread:$0]  %s125, 2048, %s127, %s117, 256, 128, 8
        $region24: #{tpu_custom_call.1} parent=19 // pred_fallthru
          _
      $region20: #{tpu_custom_call.1} parent=5 // pred_fallthru
        _
      %p133 = scmp.le.s32.totalorder 1, %s13
      %p134 = scmp.lt.s32.totalorder %s13, 3
      %p135 = pnand %p133, %p134
      %p136 = pneg %p135
      // Predicated region
      $region25: #{tpu_custom_call.1} parent=5 // pred_check
        _
      $region26: #{tpu_custom_call.1} parent=5 // pred_check_branch
        %138 = sbr.rel (%p135) target = $region28
      $region27: #{tpu_custom_call.1} parent=5 // pred_region
        %s139 = ssub.s32 %s13, 1
        %s140 = sand.u32 %s26, 1
        %s141 = scalar_lea.sflag [#allocation4], %s140
        %s142 = sand.u32 %s26, 1
        %s143 = smul.addr %s142, 128
        %s144 = scalar_lea.vmem [#allocation3], %s143
        // Predicated region
        $region29: #{tpu_custom_call.1} parent=27 // pred_check
          %p145 = pneg %p39
        $region30: #{tpu_custom_call.1} parent=27 // pred_check_branch
          %147 = sbr.rel (%p145) target = $region32
        $region31: #{tpu_custom_call.1} parent=27 // pred_region
          %148 = dma.done %s141, 2048
        $region32: #{tpu_custom_call.1} parent=27 // pred_fallthru
          _
        // Predicated region
        $region33: #{tpu_custom_call.1} parent=27 // pred_check
          %p149 = pneg %p60
        $region34: #{tpu_custom_call.1} parent=27 // pred_check_branch
          %151 = sbr.rel (%p149) target = $region36
        $region35: #{tpu_custom_call.1} parent=27 // pred_region
          %152 = dma.done [#allocation7], 512
        $region36: #{tpu_custom_call.1} parent=27 // pred_fallthru
          _
        %s153 = sand.u32 %s26, 1
        %s154 = scalar_lea.sflag [#allocation4], %s153
        %s155 = sand.u32 %s26, 1
        %s156 = smul.addr %s155, 128
        %s157 = scalar_lea.vmem [#allocation3], %s156
        %p158 = pneg %p39
        %p159 = pneg %p36
        %p160 = pneg %p60
        %p161 = pneg %p57
        %p162 = pneg %p81
        %p163 = pneg %p78
        %p164 = scmp.eq.s32.totalorder %s18, 0
        // Predicated region
        $region37: #{tpu_custom_call.1} parent=27 // pred_check
          %p165 = pneg %p164
        $region38: #{tpu_custom_call.1} parent=27 // pred_check_branch
          %167 = sbr.rel (%p165) target = $region40
        $region39: #{tpu_custom_call.1} parent=27 // pred_region
          %vm168 = vcmask 254976
          %169 = vst.msk [vmem:[#allocation2] sm:$0x3] %vm168, 0.0
        $region40: #{tpu_custom_call.1} parent=27 // pred_fallthru
          _
        %v170 = vld [vmem:[%s144] sm:$0xff]
        %v171 = vld [vmem:[%s144 + $0x8] sm:$0xff]
        %v172 = vld [vmem:[%s144 + $0x10] sm:$0xff]
        %v173 = vld [vmem:[%s144 + $0x18] sm:$0xff]
        %v174 = vld [vmem:[%s144 + $0x20] sm:$0xff]
        %v175 = vld [vmem:[%s144 + $0x28] sm:$0xff]
        %v176 = vld [vmem:[%s144 + $0x30] sm:$0xff]
        %v177 = vld [vmem:[%s144 + $0x38] sm:$0xff]
        %v178 = vld [vmem:[%s144 + $0x40] sm:$0xff]
        %v179 = vld [vmem:[%s144 + $0x48] sm:$0xff]
        %v180 = vld [vmem:[%s144 + $0x50] sm:$0xff]
        %v181 = vld [vmem:[%s144 + $0x58] sm:$0xff]
        %v182 = vld [vmem:[%s144 + $0x60] sm:$0xff]
        %v183 = vld [vmem:[%s144 + $0x68] sm:$0xff]
        %v184 = vld [vmem:[%s144 + $0x70] sm:$0xff]
        %v185 = vld [vmem:[%s144 + $0x78] sm:$0xff]
        %v186 = vadd.f32 %v170, %v174
        %v187 = vadd.f32 %v171, %v175
        %v188 = vadd.f32 %v172, %v176
        %v189 = vadd.f32 %v173, %v177
        %v190 = vadd.f32 %v178, %v182
        %v191 = vadd.f32 %v179, %v183
        %v192 = vadd.f32 %v180, %v184
        %v193 = vadd.f32 %v181, %v185
        %v194 = vld [vmem:[#allocation2] sm:$0x3]
        %195 = vadd.xlane.f32.xlu0 %v186
        %v196 = vpop.xlane.xlu0 %195
        %197 = vadd.xlane.f32.xlu0 %v187
        %v198 = vpop.xlane.xlu0 %197
        %199 = vadd.xlane.f32.xlu0 %v188
        %v200 = vpop.xlane.xlu0 %199
        %201 = vadd.xlane.f32.xlu0 %v189
        %v202 = vpop.xlane.xlu0 %201
        %203 = vadd.xlane.f32.xlu0 %v190
        %v204 = vpop.xlane.xlu0 %203
        %205 = vadd.xlane.f32.xlu0 %v191
        %v206 = vpop.xlane.xlu0 %205
        %207 = vadd.xlane.f32.xlu0 %v192
        %v208 = vpop.xlane.xlu0 %207
        %209 = vadd.xlane.f32.xlu0 %v193
        %v210 = vpop.xlane.xlu0 %209
        %v219 = vlaneseq
        %v220 = vand.u32 %v219, 127
        %v221 = vlaneseq
        %v222 = vshrl.u32 %v221, 7
        %v223 = vsub.s32 %v220, %v222
        %v224 = vrot.slane %v196, %v223
        %v225 = vadd.s32 %v220, 4294967288
        %v226 = vlaneseq
        %v227 = vshrl.u32 %v226, 7
        %v228 = vsub.s32 %v225, %v227
        %v229 = vrot.slane %v198, %v228
        %vm230 = vcmask 130112
        %v231 = vsel %vm230, %v229, %v224
        %v232 = vadd.s32 %v220, 4294967280
        %v233 = vlaneseq
        %v234 = vshrl.u32 %v233, 7
        %v235 = vsub.s32 %v232, %v234
        %v236 = vrot.slane %v200, %v235
        %vm237 = vcmask 195712
        %v238 = vsel %vm237, %v236, %v231
        %v239 = vadd.s32 %v220, 4294967272
        %v240 = vlaneseq
        %v241 = vshrl.u32 %v240, 7
        %v242 = vsub.s32 %v239, %v241
        %v243 = vrot.slane %v202, %v242
        %vm244 = vcmask 261312
        %v245 = vsel %vm244, %v243, %v238
        %v246 = vlaneseq
        %v247 = vshrl.u32 %v246, 7
        %v248 = vsub.s32 %v220, %v247
        %v249 = vrot.slane %v204, %v248
        %v250 = vlaneseq
        %v251 = vshrl.u32 %v250, 7
        %v252 = vsub.s32 %v225, %v251
        %v253 = vrot.slane %v206, %v252
        %v254 = vsel %vm230, %v253, %v249
        %v255 = vlaneseq
        %v256 = vshrl.u32 %v255, 7
        %v257 = vsub.s32 %v232, %v256
        %v258 = vrot.slane %v208, %v257
        %v259 = vsel %vm237, %v258, %v254
        %v260 = vlaneseq
        %v261 = vshrl.u32 %v260, 7
        %v262 = vsub.s32 %v239, %v261
        %v263 = vrot.slane %v210, %v262
        %v264 = vsel %vm244, %v263, %v259
        %vm265 = vcmask 1041409
        %v266 = vsel %vm265, %v264, %v245
        %v268 = vadd.f32 %v194, %v266
        %vm269 = vcmask 254976
        %270 = vst.msk [vmem:[#allocation2] sm:$0x3] %vm269, %v268
        %p271 = scmp.eq.s32.totalorder %s18, 1
        // Predicated region
        $region41: #{tpu_custom_call.1} parent=27 // pred_check
          %p272 = pneg %p271
        $region42: #{tpu_custom_call.1} parent=27 // pred_check_branch
          %274 = sbr.rel (%p272) target = $region44
        $region43: #{tpu_custom_call.1} parent=27 // pred_region
          %v275 = vld [vmem:[#allocation6] sm:$0xff]
          %v276 = vld [vmem:[#allocation6 + $0x8] sm:$0xff]
          %v277 = vld [vmem:[#allocation6 + $0x10] sm:$0xff]
          %v278 = vld [vmem:[#allocation6 + $0x18] sm:$0xff]
          %v279 = vld [vmem:[#allocation2] sm:$0x3]
          %vm280 = vcmask 261120
          %v282 = vsel %vm280, %v279, 0
          %v285 = vsel %vm280, %v275, 0
          %v288 = vsel %vm280, %v276, 0
          %v291 = vsel %vm280, %v277, 0
          %v294 = vsel %vm280, %v278, 0
          %296 = vmatprep.subr.mxu0 0.0
          %297 = vmatpush1.xpose.msra.mxu0 %v285
          %298 = vmatprep.subr.mxu0 0.0
          %299 = vmatpush1.xpose.msra.mxu0 %v288
          %300 = vmatprep.subr.mxu0 0.0
          %301 = vmatpush1.xpose.msra.mxu0 %v291
          %302 = vmatprep.subr.mxu0 0.0
          %303 = vmatpush1.xpose.msra.mxu0 %v294
          %304 = vmatprep.subr.mxu0 0.0
          %305 = vmatpush1.xpose.msra.mxu0 0.0
          %306 = vmatprep.subr.mxu0 0.0
          %307 = vmatpush1.xpose.msra.mxu0 0.0
          %308 = vmatprep.subr.mxu0 0.0
          %309 = vmatpush1.xpose.msra.mxu0 0.0
          %310 = vmatprep.subr.mxu0 0.0
          %311 = vmatpush1.xpose.msra.mxu0 0.0
          %312 = vmatprep.subr.mxu0 0.0
          %313 = vmatpush1.xpose.msra.mxu0 0.0
          %314 = vmatprep.subr.mxu0 0.0
          %315 = vmatpush1.xpose.msra.mxu0 0.0
          %316 = vmatprep.subr.mxu0 0.0
          %317 = vmatpush1.xpose.msra.mxu0 0.0
          %318 = vmatprep.subr.mxu0 0.0
          %319 = vmatpush1.xpose.msra.mxu0 0.0
          %320 = vmatprep.subr.mxu0 0.0
          %321 = vmatpush1.xpose.msra.mxu0 0.0
          %322 = vmatprep.subr.mxu0 0.0
          %323 = vmatpush1.xpose.msra.mxu0 0.0
          %324 = vmatprep.subr.mxu0 0.0
          %325 = vmatpush1.xpose.msra.mxu0 0.0
          %326 = vmatprep.subr.mxu0 0.0
          %327 = vmatpush1.xpose.msra.mxu0 0.0
          %328 = vmatprep.subr.mxu0 0.0
          %329 = vmatpush1.xpose.msra.mxu0 0.0
          %330 = vmatprep.subr.mxu0 0.0
          %331 = vmatpush1.xpose.msra.mxu0 0.0
          %332 = vmatprep.subr.mxu0 0.0
          %333 = vmatpush1.xpose.msra.mxu0 0.0
          %334 = vmatprep.subr.mxu0 0.0
          %335 = vmatpush1.xpose.msra.mxu0 0.0
          %336 = vmatprep.subr.mxu0 0.0
          %337 = vmatpush1.xpose.msra.mxu0 0.0
          %338 = vmatprep.subr.mxu0 0.0
          %339 = vmatpush1.xpose.msra.mxu0 0.0
          %340 = vmatprep.subr.mxu0 0.0
          %341 = vmatpush1.xpose.msra.mxu0 0.0
          %342 = vmatprep.subr.mxu0 0.0
          %343 = vmatpush1.xpose.msra.mxu0 0.0
          %344 = vmatprep.subr.mxu0 0.0
          %345 = vmatpush1.xpose.msra.mxu0 0.0
          %346 = vmatprep.subr.mxu0 0.0
          %347 = vmatpush1.xpose.msra.mxu0 0.0
          %348 = vmatprep.subr.mxu0 0.0
          %349 = vmatpush1.xpose.msra.mxu0 0.0
          %350 = vmatprep.subr.mxu0 0.0
          %351 = vmatpush1.xpose.msra.mxu0 0.0
          %352 = vmatprep.subr.mxu0 0.0
          %353 = vmatpush1.xpose.msra.mxu0 0.0
          %354 = vmatprep.subr.mxu0 0.0
          %355 = vmatpush1.xpose.msra.mxu0 0.0
          %356 = vmatprep.subr.mxu0 0.0
          %357 = vmatpush1.xpose.msra.mxu0 0.0
          %358 = vmatprep.subr.mxu0 0.0
          %359 = vmatpush1.xpose.msra.mxu0 0.0
          %360 = vmatprep.mubr.f32.mxu0 0.0
          %361 = vmatmul.mubr.f32.gmra.mrb[0].mxu0 %v282
          %v362 = vpop.f32.mrb[0].mxu0
          %v363 = vadd.f32 0.0, %v362
          %v364 = vpop.f32.mrb[0].mxu0
          %365 = vdwg.mxu0
          %v366 = vmul.f32 %v363, 0.001953125
          %367 = vst.msk [vmem:[#allocation8] sm:$0x3] %vm269, %v366
        $region44: #{tpu_custom_call.1} parent=27 // pred_fallthru
          _
        // Predicated region
        $region45: #{tpu_custom_call.1} parent=27 // pred_check
          %p368 = pneg %p78
        $region46: #{tpu_custom_call.1} parent=27 // pred_check_branch
          %370 = sbr.rel (%p368) target = $region48
        $region47: #{tpu_custom_call.1} parent=27 // pred_region
          %s372 = ssub.s32 32, 32
          %373 = vsyncadd [#allocation5], %s372
          %s375 = sshll.u32 [#allocation8], 4
          %s376 = int_to_ptr.vmem [resolvable:$true] %s375
          %378 = dma.vmem_to_hbm [thread:$0]  %s376, 32, %s2, [#allocation5]
        $region48: #{tpu_custom_call.1} parent=27 // pred_fallthru
          _
        // Predicated region
        $region49: #{tpu_custom_call.1} parent=27 // pred_check
          %p379 = pneg %p78
        $region50: #{tpu_custom_call.1} parent=27 // pred_check_branch
          %381 = sbr.rel (%p379) target = $region52
        $region51: #{tpu_custom_call.1} parent=27 // pred_region
          %382 = dma.done [#allocation5], 32
        $region52: #{tpu_custom_call.1} parent=27 // pred_fallthru
          _
      $region28: #{tpu_custom_call.1} parent=5 // pred_fallthru
        _
      %p383 = scmp.le.s32.totalorder 2, %s13
      // Predicated region
      $region53: #{tpu_custom_call.1} parent=5 // pred_check
        %p384 = pneg %p383
      $region54: #{tpu_custom_call.1} parent=5 // pred_check_branch
        %386 = sbr.rel (%p384) target = $region56
      $region55: #{tpu_custom_call.1} parent=5 // pred_region
        %s387 = ssub.s32 %s13, 2
      $region56: #{tpu_custom_call.1} parent=5 // pred_fallthru
        _
    $region6: #{tpu_custom_call.1} parent=1 // loop_footer
      %s17 = sadd.s32 1, %s13
    $region7: #{tpu_custom_call.1} parent=1 // loop_footer_branch
      %12 = sbr.rel target = $region3
    $region8: #{tpu_custom_call.1} parent=1 // loop_exit
      _
    %388 = vsyncpa [#allocation4], 1
    %s389 = scalar_lea.sflag [#allocation4], 1
    %390 = vsyncpa %s389, 1
    %391 = vsyncpa [#allocation7], 1
    %392 = vsyncpa [#allocation5], 1
    %s393 = scalar_lea.sflag [#allocation5], 1
    %394 = vsyncpa %s393, 1

</llo_original>
